<compile_context>
chip_gen: v6e
topology: v6e:2x2x1
jax: 0.10.0
libtpu: 0.0.40
codegen_flags: <defaults>
</compile_context>

<pallas_src>
import functools

import jax
import jax.numpy as jnp
from jax.experimental import pallas as pl
from jax.experimental.pallas import tpu as pltpu


def self_attention_kernel(x_ref, w_ref, b_ref, rep_ref, scores_ref):
    # x_ref:      (TB, S, A) VMEM, input dtype (f32 or bf16)
    # w_ref:      (1, A)     VMEM (PyTorch Linear weight layout: (out=1, in=A))
    # b_ref:      (1, 1)     SMEM scalar bias
    # rep_ref:    (TB, A)    VMEM output (sublane/lane dense)
    # scores_ref: (TB, S)    VMEM output (sublane/lane dense)
    x = x_ref[...]
    xf = x.astype(jnp.float32)                 # no-op for f32 inputs
    w = w_ref[...].astype(jnp.float32)         # (1, A)
    b = b_ref[0, 0]                            # f32 scalar

    # Linear(A -> 1) on the VPU: elementwise multiply (w lane-broadcast over
    # batch & seq) + XLU lane reduce over A.  Output dim is 1, so the MXU
    # would run at <1% utilization here -- keep it off the MXU entirely.
    logits = jnp.sum(xf * w, axis=-1)          # (TB, S), f32

    # Tanh activation (EUP); Dropout(p=0.0) is identity in eval.
    act = jnp.tanh(logits + b)                 # (TB, S)

    # Numerically-stable softmax over the sequence axis (lanes).
    m = jnp.max(act, axis=-1, keepdims=True)   # (TB, 1)
    e = jnp.exp(act - m)                       # (TB, S)
    denom = jnp.sum(e, axis=-1, keepdims=True) # (TB, 1)
    r = pl.reciprocal(denom, approx=True)      # EUP vrcp
    r = r * (2.0 - denom * r)                  # Newton step -> ~f32 exact
    sm = e * r                                 # (TB, S), f32

    scores_ref[...] = sm.astype(scores_ref.dtype)

    # Weighted pooling on the VPU: scores lane-broadcast over A, multiply,
    # then a cheap XLU sublane reduce over S (S is the sublane dim of the
    # x block).  Accumulation stays in f32.
    rep = jnp.sum(xf * sm[:, :, jnp.newaxis], axis=1)   # (TB, A), f32
    rep_ref[...] = rep.astype(rep_ref.dtype)


def _vmem_limit_bytes():
    """Scoped-VMEM limit with headroom under the physical per-TC capacity."""
    try:
        cap = int(pltpu.get_tpu_info().vmem_capacity_bytes)
    except Exception:
        cap = 64 * 1024 * 1024   # conservative v7x per-TensorCore fallback
    return int(min(cap * 3 // 4, 96 * 1024 * 1024))


def _pick_block_b(B, S, A, itemsize, vmem_limit):
    """Batch tile sized from the VMEM budget, sublane-friendly, and capped so
    large batches get >= 4 grid steps (2 per TensorCore on v7x)."""
    budget = max(2 * 1024 * 1024, vmem_limit // 8)   # per x block (2x buffered)
    per_row = max(1, S * A * itemsize)
    tb = max(1, budget // per_row)
    cap = -(-B // 4)            # ceil(B / 4) grid steps when batch is large
    if cap >= 8:
        tb = min(tb, cap)
    if tb >= B:
        return B
    if tb >= 8:
        tb = (tb // 8) * 8      # sublane-dense tile when tiling
    return max(1, min(tb, B))


@functools.partial(jax.jit, static_argnames=("block_b",))
def self_attention(x, w, b, *, block_b=None):
    """x: (B, S, A), w: (1, A) (Linear weight), b: (1,) (Linear bias)."""
    B, S, A = x.shape
    itemsize = jnp.dtype(x.dtype).itemsize
    vmem_limit = _vmem_limit_bytes()
    tb = block_b if block_b is not None else _pick_block_b(B, S, A, itemsize,
                                                           vmem_limit)
    tb = int(min(tb, B))

    b2 = b.reshape(1, 1).astype(jnp.float32)       # scalar bias -> (1,1) SMEM

    grid = (pl.cdiv(B, tb),)

    out_shapes = (
        jax.ShapeDtypeStruct((B, A), x.dtype),     # representations
        jax.ShapeDtypeStruct((B, S), x.dtype),     # attention scores
    )

    grid_spec = pltpu.PrefetchScalarGridSpec(
        num_scalar_prefetch=0,
        grid=grid,
        in_specs=[
            pl.BlockSpec((tb, S, A), lambda i: (i, 0, 0)),            # x block
            pl.BlockSpec((1, A), lambda i: (0, 0)),                   # weight
            pl.BlockSpec((1, 1), lambda i: (0, 0),
                         memory_space=pltpu.MemorySpace.SMEM),        # bias
        ],
        out_specs=(
            pl.BlockSpec((tb, A), lambda i: (i, 0)),
            pl.BlockSpec((tb, S), lambda i: (i, 0)),
        ),
    )

    rep, scores = pl.pallas_call(
        self_attention_kernel,
        out_shape=out_shapes,
        grid_spec=grid_spec,
        compiler_params=pltpu.CompilerParams(
            dimension_semantics=("parallel",),     # shard batch across TCs (v7x)
            vmem_limit_bytes=vmem_limit,
        ),
        cost_estimate=pl.CostEstimate(
            flops=4 * B * S * A,
            transcendentals=2 * B * S,
            bytes_accessed=(B * S * A + B * A + B * S + A) * itemsize,
        ),
    )(x, w, b2)

    return rep, scores


if __name__ == "__main__":
    B, S, A = 2, 8, 32   # batch, seq_len, attention_size

    key = jax.random.PRNGKey(0)
    kx, kw = jax.random.split(key)

    x = jax.random.normal(kx, (B, S, A), dtype=jnp.float32)
    # Deterministic init mirroring init_weights: uniform(-0.1, 0.1) weight, 0.01 bias.
    w = jax.random.uniform(kw, (1, A), minval=-0.1, maxval=0.1, dtype=jnp.float32)
    b = jnp.full((1,), 0.01, dtype=jnp.float32)

    rep, scores = self_attention(x, w, b)
    jax.block_until_ready((rep, scores))

    # Pure-JAX reference of the same semantics.
    logits_ref = jnp.einsum("bsa,a->bs", x, w[0]) + b[0]
    scores_ref = jax.nn.softmax(jnp.tanh(logits_ref), axis=-1)
    rep_ref = jnp.sum(x * scores_ref[..., None], axis=1)

    assert rep.shape == (B, A) and scores.shape == (B, S)
    assert jnp.allclose(jnp.sum(scores, axis=-1), 1.0, atol=1e-4)
    assert jnp.allclose(scores, scores_ref, atol=1e-4, rtol=1e-4)
    assert jnp.allclose(rep, rep_ref, atol=1e-4, rtol=1e-4)

    print("KERNEL_OK")
</pallas_src>

<mosaic_0001>
module attributes {stable_mosaic.version = 11 : i64} {
  func.func @self_attention_kernel(%arg0: i32, %arg1: memref<2x8x32xf32, #tpu.memory_space<vmem>>, %arg2: memref<1x32xf32, #tpu.memory_space<vmem>>, %arg3: memref<1x1xf32, #tpu.memory_space<smem>>, %arg4: memref<2x32xf32, #tpu.memory_space<vmem>>, %arg5: memref<2x8xf32, #tpu.memory_space<vmem>>) attributes {dimension_semantics = [#tpu.dimension_semantics<parallel>], iteration_bounds = array<i64: 1>, scalar_prefetch = 0 : i64, scratch_operands = 0 : i64, tpu.core_type = #tpu.core_type<tc>, window_params = [{transform_indices = @transform_0, window_bounds = array<i64: 2, 8, 32>}, {pipeline_mode = #tpu.pipeline_mode<synchronous>, transform_indices = @transform_1, window_bounds = array<i64: 1, 32>}, {transform_indices = @transform_2, window_bounds = array<i64: 1, 1>}, {transform_indices = @transform_3, window_bounds = array<i64: 2, 32>}, {transform_indices = @transform_4, window_bounds = array<i64: 2, 8>}]} {
    %c0 = arith.constant 0 : index
    %c0_0 = arith.constant 0 : index
    %c0_1 = arith.constant 0 : index
    %0 = vector.load %arg1[%c0, %c0_0, %c0_1] : memref<2x8x32xf32, #tpu.memory_space<vmem>>, vector<2x8x32xf32>
    %c0_2 = arith.constant 0 : index
    %c0_3 = arith.constant 0 : index
    %1 = vector.load %arg2[%c0_2, %c0_3] : memref<1x32xf32, #tpu.memory_space<vmem>>, vector<1x32xf32>
    %c0_4 = arith.constant 0 : index
    %c0_5 = arith.constant 0 : index
    %2 = memref.load %arg3[%c0_4, %c0_5] : memref<1x1xf32, #tpu.memory_space<smem>>
    %3 = vector.shape_cast %1 : vector<1x32xf32> to vector<1x1x32xf32>
    %4 = vector.broadcast %3 : vector<1x1x32xf32> to vector<2x8x32xf32>
    %5 = arith.mulf %0, %4 : vector<2x8x32xf32>
    %cst = arith.constant dense<0.000000e+00> : vector<2x8xf32>
    %6 = vector.multi_reduction <add>, %5, %cst [2] : vector<2x8x32xf32> to vector<2x8xf32>
    %7 = vector.broadcast %2 : f32 to vector<2x8xf32>
    %8 = arith.addf %6, %7 : vector<2x8xf32>
    %9 = math.tanh %8 : vector<2x8xf32>
    %cst_6 = arith.constant dense<0xFF800000> : vector<2xf32>
    %10 = vector.multi_reduction <maximumf>, %9, %cst_6 [1] : vector<2x8xf32> to vector<2xf32>
    %11 = vector.shape_cast %10 : vector<2xf32> to vector<2x1xf32>
    %12 = vector.broadcast %11 : vector<2x1xf32> to vector<2x8xf32>
    %13 = arith.subf %9, %12 : vector<2x8xf32>
    %14 = math.exp %13 : vector<2x8xf32>
    %cst_7 = arith.constant dense<0.000000e+00> : vector<2xf32>
    %15 = vector.multi_reduction <add>, %14, %cst_7 [1] : vector<2x8xf32> to vector<2xf32>
    %16 = vector.shape_cast %15 : vector<2xf32> to vector<2x1xf32>
    %17 = tpu.reciprocal %16 {approx = true} : vector<2x1xf32> -> vector<2x1xf32>
    %18 = arith.mulf %16, %17 : vector<2x1xf32>
    %cst_8 = arith.constant 2.000000e+00 : f32
    %19 = vector.broadcast %cst_8 : f32 to vector<2x1xf32>
    %20 = arith.subf %19, %18 : vector<2x1xf32>
    %21 = arith.mulf %17, %20 : vector<2x1xf32>
    %22 = vector.broadcast %21 : vector<2x1xf32> to vector<2x8xf32>
    %23 = arith.mulf %14, %22 : vector<2x8xf32>
    %c0_9 = arith.constant 0 : index
    %c0_10 = arith.constant 0 : index
    %24 = vector.load %arg5[%c0_9, %c0_10] : memref<2x8xf32, #tpu.memory_space<vmem>>, vector<2x8xf32>
    tpu.vector_store %arg5[%c0_9, %c0_10], %23 {strides = array<i32>} : memref<2x8xf32, #tpu.memory_space<vmem>>, vector<2x8xf32>,
    %25 = vector.shape_cast %23 : vector<2x8xf32> to vector<2x8x1xf32>
    %26 = vector.broadcast %25 : vector<2x8x1xf32> to vector<2x8x32xf32>
    %27 = arith.mulf %0, %26 : vector<2x8x32xf32>
    %cst_11 = arith.constant dense<0.000000e+00> : vector<2x32xf32>
    %28 = vector.multi_reduction <add>, %27, %cst_11 [1] : vector<2x8x32xf32> to vector<2x32xf32>
    %c0_12 = arith.constant 0 : index
    %c0_13 = arith.constant 0 : index
    %29 = vector.load %arg4[%c0_12, %c0_13] : memref<2x32xf32, #tpu.memory_space<vmem>>, vector<2x32xf32>
    tpu.vector_store %arg4[%c0_12, %c0_13], %28 {strides = array<i32>} : memref<2x32xf32, #tpu.memory_space<vmem>>, vector<2x32xf32>,
    return
  }
  func.func @transform_0(%arg0: i32) -> (i32, i32, i32) {
    %c0_i32 = arith.constant 0 : i32
    %c0_i32_0 = arith.constant 0 : i32
    %c0_i32_1 = arith.constant 0 : i32
    return %arg0, %c0_i32, %c0_i32_0 : i32, i32, i32
  }
  func.func @transform_1(%arg0: i32) -> (i32, i32) {
    %c0_i32 = arith.constant 0 : i32
    %c0_i32_0 = arith.constant 0 : i32
    %c0_i32_1 = arith.constant 0 : i32
    return %c0_i32, %c0_i32_0 : i32, i32
  }
  func.func @transform_2(%arg0: i32) -> (i32, i32) {
    %c0_i32 = arith.constant 0 : i32
    %c0_i32_0 = arith.constant 0 : i32
    %c0_i32_1 = arith.constant 0 : i32
    return %c0_i32, %c0_i32_0 : i32, i32
  }
  func.func @transform_3(%arg0: i32) -> (i32, i32) {
    %c0_i32 = arith.constant 0 : i32
    %c0_i32_0 = arith.constant 0 : i32
    return %arg0, %c0_i32 : i32, i32
  }
  func.func @transform_4(%arg0: i32) -> (i32, i32) {
    %c0_i32 = arith.constant 0 : i32
    %c0_i32_0 = arith.constant 0 : i32
    return %arg0, %c0_i32 : i32, i32
  }
}

</mosaic_0001>

<llo_original>
// kernel: self_attention.1
$region0: #{self_attention.1}
  #allocation0 [shape = 'u32[]', space=smem, size = 0x4, offset = 0x4, fixed_abs, tag = 'smem constant byte address 0x4 - core index']
  #allocation1 [shape = 'u32[144,128]{1,0:T(1,128)}', space=vmem, size = 0x12000, scoped, tag = 'internal scratch']
  #allocation2 [shape = 'f32[1,1]{1,0:T(1,128)S(6)}', space=smem, size = 0x200, scoped, tag = 'scoped memory for self_attention.1']
  %s0 = inlined_call_operand.hbm [shape: f32[2,8,32], index: 0, kind: input, shape index: {}]
  %s1 = inlined_call_operand.vmem [shape: f32[1,32], index: 1, kind: input, shape index: {}]
  %s2 = inlined_call_operand.<no memory space> [shape: f32[1,1], index: 2, kind: input, shape index: {}]
  %s3 = inlined_call_operand.hbm [shape: f32[2,32], index: 3, kind: output, shape index: {0}]
  %s4 = inlined_call_operand.hbm [shape: f32[2,8], index: 4, kind: output, shape index: {1}]
  %5 = xla_tuple %s3, %s4
  %s6 = sld [smem:[#allocation0]]
  $region34: #{self_attention.1} parent=0
    _
  %s8 = ssub.s32 1, %s6
  %s9 = scalar_select 0, %s8, %s6
  %10 = sst [smem:[#allocation2]] %s2
  $region1: #{self_attention.1} parent=0
    #allocation3 [shape = 'u8[8192]{0}', space=vmem, size = 0x2000, scoped, tag = 'input window, operand 0, single buffered']
    #allocation4 [shape = 's32[1]{0}', space=sflag, size = 0x4, scoped, tag = 'scoped memory for self_attention.1']
    #allocation5 [shape = 's32[1]{0}', space=sflag, size = 0x4, scoped, tag = 'scoped memory for self_attention.1']
    #allocation6 [shape = 'u8[1024]{0}', space=vmem, size = 0x400, scoped, tag = 'output window, operand 0, single buffered']
    #allocation7 [shape = 'u8[1024]{0}', space=vmem, size = 0x400, scoped, tag = 'output window, operand 1, single buffered']
    #allocation8 [shape = 's32[1]{0}', space=sflag, size = 0x4, scoped, tag = 'scoped memory for self_attention.1']
    %11 = vsyncpa [#allocation4], 0
    %12 = vsyncpa [#allocation5], 0
    %13 = vsyncpa [#allocation8], 0
    // Predicated region
    $region2: #{self_attention.1} parent=1 // pred_check
      _
    $region3: #{self_attention.1} parent=1 // pred_check_branch
      %15 = sbr.rel (0) target = $region5
    $region4: #{self_attention.1} parent=1 // pred_region
      %s17 = ssub.s32 256, 256
      %18 = vsyncadd [#allocation4], %s17
      %s19 = sshll.u32 [#allocation3], 4
      %s20 = int_to_ptr.vmem [resolvable:$true] %s19
      %25 = dma.hbm_to_vmem [thread:$0]  %s0, 256, %s20, [#allocation4], 128, 128, 8
    $region5: #{self_attention.1} parent=1 // pred_fallthru
      _
    // Predicated region
    $region6: #{self_attention.1} parent=1 // pred_check
      _
    $region7: #{self_attention.1} parent=1 // pred_check_branch
      %27 = sbr.rel (0) target = $region9
    $region8: #{self_attention.1} parent=1 // pred_region
      _
    $region9: #{self_attention.1} parent=1 // pred_fallthru
      _
    // Predicated region
    $region10: #{self_attention.1} parent=1 // pred_check
      _
    $region11: #{self_attention.1} parent=1 // pred_check_branch
      %29 = sbr.rel (0) target = $region13
    $region12: #{self_attention.1} parent=1 // pred_region
      _
    $region13: #{self_attention.1} parent=1 // pred_fallthru
      _
    // Predicated region
    $region14: #{self_attention.1} parent=1 // pred_check
      _
    $region15: #{self_attention.1} parent=1 // pred_check_branch
      %31 = sbr.rel (0) target = $region17
    $region16: #{self_attention.1} parent=1 // pred_region
      %32 = dma.done [#allocation4], 256
    $region17: #{self_attention.1} parent=1 // pred_fallthru
      _
    %v33 = vld [vmem:[#allocation3] sm:$0xff]
    %v34 = vld [vmem:[#allocation3 + $0x8] sm:$0xff]
    %v35 = vld [vmem:[%s1] sm:$0x1]
    %s36 = sld [smem:[#allocation2]]
    %v38 = vlaneseq
    %v39 = vshrl.u32 %v38, 7
    %v40 = vsub.s32 0, %v39
    %v41 = vrot.slane %v35, %v40
    %v43 = vmul.f32 %v33, %v41
    %v44 = vmul.f32 %v34, %v41
    %vm45 = vcmask 261120
    %v46 = vsel %vm45, %v43, 0.0
    %47 = vadd.xlane.f32.xlu0 %v46
    %v48 = vpop.xlane.xlu0 %47
    %v49 = vsel %vm45, %v44, 0.0
    %50 = vadd.xlane.f32.xlu0 %v49
    %v51 = vpop.xlane.xlu0 %50
    %v52 = vstv %s36
    %v53 = vadd.f32 %v48, %v52
    %v54 = vadd.f32 %v51, %v52
    %v55 = vtanh.pop %v53
    %v56 = vtanh.pop %v54
    %v59 = vlaneseq
    %v60 = vand.u32 %v59, 127
    %v61 = vlaneseq
    %v62 = vshrl.u32 %v61, 7
    %v63 = vsub.s32 %v60, %v62
    %v64 = vrot.slane %v55, %v63
    %v65 = vlaneseq
    %v66 = vshrl.u32 %v65, 7
    %v67 = vsub.s32 %v60, %v66
    %v68 = vrot.slane %v56, %v67
    %vm69 = vcmask 1041409
    %v70 = vsel %vm69, %v68, %v64
    %vm72 = vcmask 58368
    %v73 = vsel %vm72, %v70, -inf
    %74 = vmax.xlane.f32.xlu0 %v73
    %v75 = vpop.xlane.xlu0 %74
    %v77 = vlaneseq
    %v78 = vshrl.u32 %v77, 7
    %v79 = vsub.s32 0, %v78
    %v80 = vrot.slane %v75, %v79
    %v81 = vlaneseq
    %v82 = vshrl.u32 %v81, 7
    %v83 = vsub.s32 1, %v82
    %v84 = vrot.slane %v75, %v83
    %v87 = vsub.f32 %v55, %v80
    %v88 = vsub.f32 %v56, %v84
    %v89 = vmul.f32 %v87, 1.442695
    %v90 = vpow.pop %v89
    %v91 = vmul.f32 %v88, 1.442695
    %v92 = vpow.pop %v91
    %95 = vset.pattern.permute.xlu0 0
    %96 = vperm.xlu0 %95, %v90
    %v97 = vpop.permute.xlu0 %96
    %98 = vset.pattern.permute.xlu0 0
    %99 = vperm.xlu0 %98, %v92
    %v100 = vpop.permute.xlu0 %99
    %v101 = vlaneseq
    %v102 = vshrl.u32 %v101, 7
    %v103 = vsub.s32 %v60, %v102
    %v104 = vrot.slane %v97, %v103
    %v105 = vlaneseq
    %v106 = vshrl.u32 %v105, 7
    %v107 = vsub.s32 %v60, %v106
    %v108 = vrot.slane %v100, %v107
    %v109 = vsel %vm69, %v108, %v104
    %v111 = vsel %vm72, %v109, 0.0
    %112 = vadd.xlane.f32.xlu0 %v111
    %v113 = vpop.xlane.xlu0 %112
    %v114 = vrcp.pop %v113
    %v115 = vmul.f32 %v113, %v114
    %v116 = vsub.f32 2.0, %v115
    %v117 = vmul.f32 %v114, %v116
    %v119 = vlaneseq
    %v120 = vshrl.u32 %v119, 7
    %v121 = vsub.s32 0, %v120
    %v122 = vrot.slane %v117, %v121
    %v123 = vlaneseq
    %v124 = vshrl.u32 %v123, 7
    %v125 = vsub.s32 1, %v124
    %v126 = vrot.slane %v117, %v125
    %v129 = vmul.f32 %v90, %v122
    %v130 = vmul.f32 %v92, %v126
    %133 = vset.pattern.permute.xlu0 0
    %134 = vperm.xlu0 %133, %v129
    %v135 = vpop.permute.xlu0 %134
    %136 = vset.pattern.permute.xlu0 0
    %137 = vperm.xlu0 %136, %v130
    %v138 = vpop.permute.xlu0 %137
    %v139 = vlaneseq
    %v140 = vshrl.u32 %v139, 7
    %v141 = vsub.s32 %v60, %v140
    %v142 = vrot.slane %v135, %v141
    %v143 = vlaneseq
    %v144 = vshrl.u32 %v143, 7
    %v145 = vsub.s32 %v60, %v144
    %v146 = vrot.slane %v138, %v145
    %v147 = vsel %vm69, %v146, %v142
    %149 = vst.msk [vmem:[#allocation7] sm:$0x3] %vm72, %v147
    %v152 = vmul.f32 %v33, %v135
    %v153 = vmul.f32 %v34, %v138
    %v154 = vsel %vm45, %v152, 0.0
    %v155 = vrot.slane %v154, 4
    %v156 = vadd.f32 %v154, %v155
    %v157 = vrot.slane %v156, 2
    %v158 = vadd.f32 %v156, %v157
    %v159 = vrot.slane %v158, 1
    %v160 = vadd.f32 %v158, %v159
    %v161 = vsel %vm45, %v153, 0.0
    %v162 = vrot.slane %v161, 4
    %v163 = vadd.f32 %v161, %v162
    %v164 = vrot.slane %v163, 2
    %v165 = vadd.f32 %v163, %v164
    %v166 = vrot.slane %v165, 1
    %v167 = vadd.f32 %v165, %v166
    %v170 = vsel %vm69, %v167, %v160
    %vm172 = vcmask 254976
    %173 = vst.msk [vmem:[#allocation6] sm:$0x3] %vm172, %v170
    // Predicated region
    $region18: #{self_attention.1} parent=1 // pred_check
      _
    $region19: #{self_attention.1} parent=1 // pred_check_branch
      %175 = sbr.rel (0) target = $region21
    $region20: #{self_attention.1} parent=1 // pred_region
      %s177 = ssub.s32 32, 32
      %178 = vsyncadd [#allocation5], %s177
      %s180 = sshll.u32 [#allocation6], 4
      %s181 = int_to_ptr.vmem [resolvable:$true] %s180
      %183 = dma.vmem_to_hbm [thread:$0]  %s181, 32, %s3, [#allocation5]
    $region21: #{self_attention.1} parent=1 // pred_fallthru
      _
    // Predicated region
    $region22: #{self_attention.1} parent=1 // pred_check
      _
    $region23: #{self_attention.1} parent=1 // pred_check_branch
      %185 = sbr.rel (0) target = $region25
    $region24: #{self_attention.1} parent=1 // pred_region
      %s187 = ssub.s32 32, 32
      %188 = vsyncadd [#allocation8], %s187
      %s190 = sshll.u32 [#allocation7], 4
      %s191 = int_to_ptr.vmem [resolvable:$true] %s190
      %193 = dma.vmem_to_hbm [thread:$0]  %s191, 32, %s4, [#allocation8]
    $region25: #{self_attention.1} parent=1 // pred_fallthru
      _
    // Predicated region
    $region26: #{self_attention.1} parent=1 // pred_check
      _
    $region27: #{self_attention.1} parent=1 // pred_check_branch
      %195 = sbr.rel (0) target = $region29
    $region28: #{self_attention.1} parent=1 // pred_region
      %196 = dma.done [#allocation5], 32
    $region29: #{self_attention.1} parent=1 // pred_fallthru
      _
    // Predicated region
    $region30: #{self_attention.1} parent=1 // pred_check
      _
    $region31: #{self_attention.1} parent=1 // pred_check_branch
      %198 = sbr.rel (0) target = $region33
    $region32: #{self_attention.1} parent=1 // pred_region
      %199 = dma.done [#allocation8], 32
    $region33: #{self_attention.1} parent=1 // pred_fallthru
      _
    %200 = vsyncpa [#allocation4], 1
    %201 = vsyncpa [#allocation5], 1
    %202 = vsyncpa [#allocation8], 1

</llo_original>
